<compile_context>
chip_gen: v7x
topology: tpu7x:2x2x1
jax: 0.10.0
libtpu: 0.0.40
codegen_flags: <defaults>
</compile_context>

<pallas_src>
import functools

import jax
import jax.numpy as jnp
from jax import lax
from jax.experimental import pallas as pl
from jax.experimental.pallas import tpu as pltpu

_EPS = 1e-8  # matches torch.nn.CosineSimilarity(eps=1e-8)


def _round_up(a, b):
    return (a + b - 1) // b * b


def _sublane_granule(dtype):
    # Sub-32-bit dtypes pack along sublanes: bf16 vreg is [16,128], int8 [32,128].
    return {4: 8, 2: 16, 1: 32}.get(jnp.dtype(dtype).itemsize, 8)


# --------------------------- fused single-tile path ---------------------------

def _fused_kernel(x_ref, y_ref, o_ref, *, inv_temp):
    """Small-problem kernel: normalize rows in f32, one MXU matmul, done."""
    xf = x_ref[...].astype(jnp.float32)
    yf = y_ref[...].astype(jnp.float32)
    eps2 = _EPS * _EPS
    xs = inv_temp * lax.rsqrt(jnp.maximum(jnp.sum(xf * xf, axis=-1, keepdims=True), eps2))
    ys = lax.rsqrt(jnp.maximum(jnp.sum(yf * yf, axis=-1, keepdims=True), eps2))
    xn = xf * xs                                            # (M, H)
    yn = yf * ys                                            # (N, H)
    o_ref[...] = lax.dot_general(
        xn, yn,
        dimension_numbers=(((1,), (1,)), ((), ())),
        preferred_element_type=jnp.float32).astype(o_ref.dtype)


# ------------------------------- tiled path ----------------------------------

def _row_scale_kernel(v_ref, o_ref, acc_ref, *, scale):
    """Per-row scale: scale * rsqrt(max(||v_i||^2, eps^2)), K-tiled accumulation."""
    k = pl.program_id(1)

    @pl.when(k == 0)
    def _():
        acc_ref[...] = jnp.zeros_like(acc_ref)

    v = v_ref[...].astype(jnp.float32)                      # (T, TK)
    acc_ref[...] += jnp.sum(v * v, axis=-1, keepdims=True)  # (T, 1)

    @pl.when(k == pl.num_programs(1) - 1)
    def _():
        o_ref[...] = scale * lax.rsqrt(jnp.maximum(acc_ref[...], _EPS * _EPS))


def _similarity_kernel(x_ref, y_ref, xs_ref, ys_ref, o_ref, acc_ref):
    k = pl.program_id(2)

    @pl.when(k == 0)
    def _():
        acc_ref[...] = jnp.zeros_like(acc_ref)

    # MXU matmul in the inputs' native dtype, f32 accumulation. Contract the trailing
    # feature axis of both tiles (y kept in natural (N, K) layout).
    acc_ref[...] += lax.dot_general(
        x_ref[...], y_ref[...],
        dimension_numbers=(((1,), (1,)), ((), ())),
        preferred_element_type=jnp.float32)                 # (TM, TN) f32

    @pl.when(k == pl.num_programs(2) - 1)
    def _():
        # Rank-1 scaling: (TM,1) * (1,TN); 1/temp already folded into xs.
        o_ref[...] = (acc_ref[...] * xs_ref[...] * ys_ref[...]).astype(o_ref.dtype)


def similarity_pairwise(x2d, y2d, temp, *, out_dtype=jnp.float32, mm_dtype=None):
    """cos_sim(x2d[:, None, :], y2d[None, :, :], dim=-1) / temp  ->  (M, N)."""
    M, H = x2d.shape
    N, Hy = y2d.shape
    assert H == Hy, "feature dims must match"
    inv_temp = 1.0 / float(temp)

    # ---- single-tile fast path: no prepass launches, no padding ----
    if M <= 256 and N <= 256 and H <= 2048:
        return pl.pallas_call(
            functools.partial(_fused_kernel, inv_temp=inv_temp),
            out_shape=jax.ShapeDtypeStruct((M, N), out_dtype),
            grid=(1,),
            in_specs=[pl.BlockSpec((M, H), lambda i: (0, 0)),
                      pl.BlockSpec((N, H), lambda i: (0, 0))],
            out_specs=pl.BlockSpec((M, N), lambda i: (0, 0)),
        )(x2d, y2d)

    # ---- tiled path ----
    sub = _sublane_granule(x2d.dtype)
    TM = 512 if M >= 512 else (256 if M >= 256 else _round_up(max(M, 1), sub))
    TN = 256 if N >= 256 else _round_up(max(N, 1), 128)

    Hp128 = _round_up(H, 128)
    if Hp128 <= 1024:           # single K step, still VMEM-safe
        TK = Hp128
        Hp = Hp128
    else:                       # K-tile large hidden dims
        TK = 512
        Hp = _round_up(H, TK)

    Mp = _round_up(M, TM)
    Np = _round_up(N, TN)
    nk = Hp // TK

    xp = x2d if (Mp == M and Hp == H) else jnp.pad(x2d, ((0, Mp - M), (0, Hp - H)))
    yp = y2d if (Np == N and Hp == H) else jnp.pad(y2d, ((0, Np - N), (0, Hp - H)))
    # Zero-padded rows have ||row||^2 = 0 -> clamped to eps^2 -> finite scale; padded
    # output rows/cols are sliced off below. Zero-padded H columns add 0 to dot & norm.

    def row_scales(v, row_tile, scale):
        rows = v.shape[0]
        return pl.pallas_call(
            functools.partial(_row_scale_kernel, scale=scale),
            out_shape=jax.ShapeDtypeStruct((rows, 1), jnp.float32),
            grid=(rows // row_tile, nk),
            in_specs=[pl.BlockSpec((row_tile, TK), lambda i, k: (i, k))],
            out_specs=pl.BlockSpec((row_tile, 1), lambda i, k: (i, 0)),
            scratch_shapes=[pltpu.VMEM((row_tile, 1), jnp.float32)],
            compiler_params=pltpu.CompilerParams(
                dimension_semantics=("parallel", "arbitrary")),
        )(v)

    # O(M+N) prepass: norms computed exactly once (not once per output tile).
    x_scale = row_scales(xp, TM, inv_temp)                  # (Mp, 1), carries 1/temp
    y_scale = row_scales(yp, TN, 1.0).reshape(1, Np)        # (1, Np), lane-major

    # Optional bf16 matmul operands (e.g. v5e); norms stay f32 from original values.
    x_mm = xp.astype(mm_dtype) if mm_dtype is not None else xp
    y_mm = yp.astype(mm_dtype) if mm_dtype is not None else yp

    in_b = jnp.dtype(x_mm.dtype).itemsize
    out_b = jnp.dtype(out_dtype).itemsize
    # Actual per-call VMEM footprint: double-buffered x, y, scales, out + f32 accumulator.
    tile_bytes = (2 * TM * TK * in_b + 2 * TN * TK * in_b
                  + 2 * TM * 4 + 2 * TN * 4
                  + 2 * TM * TN * out_b + TM * TN * 4)
    vmem_limit = int(min(max(2 * tile_bytes, 16 * 1024 * 1024), 40 * 1024 * 1024))

    cost = pl.CostEstimate(
        flops=2 * M * N * H,
        transcendentals=0,
        bytes_accessed=M * H * in_b + N * H * in_b + M * N * out_b)

    out = pl.pallas_call(
        _similarity_kernel,
        out_shape=jax.ShapeDtypeStruct((Mp, Np), out_dtype),
        grid=(Mp // TM, Np // TN, nk),
        in_specs=[
            pl.BlockSpec((TM, TK), lambda i, j, k: (i, k)),
            pl.BlockSpec((TN, TK), lambda i, j, k: (j, k)),
            pl.BlockSpec((TM, 1), lambda i, j, k: (i, 0)),
            pl.BlockSpec((1, TN), lambda i, j, k: (0, j)),
        ],
        out_specs=pl.BlockSpec((TM, TN), lambda i, j, k: (i, j)),
        scratch_shapes=[pltpu.VMEM((TM, TN), jnp.float32)],
        compiler_params=pltpu.CompilerParams(
            dimension_semantics=("parallel", "parallel", "arbitrary"),
            vmem_limit_bytes=vmem_limit),
        cost_estimate=cost,
    )(x_mm, y_mm, x_scale, y_scale)

    return out[:M, :N]


def similarity(x, y, temp, out_dtype=jnp.float32):
    """Mirror of Similarity.forward for the SimCSE broadcast pattern.

    Accepts x of shape (M, 1, H) and y of shape (1, N, H) (or plain 2-D (M, H) /
    (N, H)) and returns the (M, N) matrix cos(x, y) / temp.
    """
    # TODO(synk): general torch broadcasting / elementwise cosine (same-shape inputs)
    # is not implemented; only the pairwise SimCSE pattern is supported.
    if x.ndim == 3:
        assert x.shape[1] == 1, "expected x of shape (M, 1, H)"
        x = x.reshape(x.shape[0], x.shape[2])
    if y.ndim == 3:
        assert y.shape[0] == 1, "expected y of shape (1, N, H)"
        y = y.reshape(y.shape[1], y.shape[2])
    return similarity_pairwise(x, y, temp, out_dtype=out_dtype)


def _reference(x2d, y2d, temp):
    # Pure-JAX reference matching torch.nn.CosineSimilarity semantics.
    xf = x2d.astype(jnp.float32)
    yf = y2d.astype(jnp.float32)
    dots = xf @ yf.T
    xn = jnp.linalg.norm(xf, axis=-1, keepdims=True)
    yn = jnp.linalg.norm(yf, axis=-1, keepdims=True)
    return dots / jnp.maximum(xn * yn.T, _EPS) / temp


if __name__ == "__main__":
    key = jax.random.PRNGKey(0)
    k1, k2, k3, k4, k5, k6, k7, k8 = jax.random.split(key, 8)

    temp = 0.05  # typical SimCSE temperature

    # 1) Small SimCSE-style call: fused single-tile path.
    B, H = 8, 32
    z1 = jax.random.normal(k1, (B, H), dtype=jnp.float32)
    z2 = jax.random.normal(k2, (B, H), dtype=jnp.float32)
    out = jax.block_until_ready(similarity(z1[:, None, :], z2[None, :, :], temp))
    ref = _reference(z1, z2, temp)
    assert out.shape == (B, B)
    assert jnp.allclose(out, ref, atol=1e-4, rtol=1e-4)

    # 2) Ragged shape: tiled path, 2x2 output grid, single K step, row/col padding.
    M2, N2, H2 = 260, 260, 64
    a = jax.random.normal(k3, (M2, H2), dtype=jnp.float32)
    b = jax.random.normal(k4, (N2, H2), dtype=jnp.float32)
    out2 = jax.block_until_ready(similarity(a[:, None, :], b[None, :, :], temp))
    ref2 = _reference(a, b, temp)
    assert out2.shape == (M2, N2)
    assert jnp.allclose(out2, ref2, atol=1e-3, rtol=1e-3)

    # 3) Large hidden dim: exercises K-tiled accumulation (nk = 3 "arbitrary" steps).
    M3, N3, H3 = 130, 270, 1536
    c = jax.random.normal(k5, (M3, H3), dtype=jnp.float32)
    d = jax.random.normal(k6, (N3, H3), dtype=jnp.float32)
    out3 = jax.block_until_ready(similarity(c[:, None, :], d[None, :, :], temp))
    ref3 = _reference(c, d, temp)
    assert out3.shape == (M3, N3)
    assert jnp.allclose(out3, ref3, atol=1e-2, rtol=1e-2)

    # 4) bf16 inputs through the fused path (f32 normalization + accumulation).
    B4, H4 = 16, 64
    e = jax.random.normal(k7, (B4, H4), dtype=jnp.float32).astype(jnp.bfloat16)
    f = jax.random.normal(k8, (B4, H4), dtype=jnp.float32).astype(jnp.bfloat16)
    out4 = jax.block_until_ready(similarity(e[:, None, :], f[None, :, :], temp))
    ref4 = _reference(e, f, temp)
    assert out4.shape == (B4, B4)
    assert jnp.allclose(out4, ref4, atol=2e-2, rtol=2e-2)

    print("KERNEL_OK")
</pallas_src>

<mosaic_0001>
module attributes {stable_mosaic.version = 11 : i64} {
  func.func @_fused_kernel(%arg0: i32, %arg1: memref<8x32xf32, #tpu.memory_space<vmem>>, %arg2: memref<8x32xf32, #tpu.memory_space<vmem>>, %arg3: memref<8x8xf32, #tpu.memory_space<vmem>>) attributes {dimension_semantics = [#tpu.dimension_semantics<arbitrary>], iteration_bounds = array<i64: 1>, scalar_prefetch = 0 : i64, scratch_operands = 0 : i64, tpu.core_type = #tpu.core_type<tc>, window_params = [{pipeline_mode = #tpu.pipeline_mode<synchronous>, transform_indices = @transform_0, window_bounds = array<i64: 8, 32>}, {pipeline_mode = #tpu.pipeline_mode<synchronous>, transform_indices = @transform_1, window_bounds = array<i64: 8, 32>}, {pipeline_mode = #tpu.pipeline_mode<synchronous>, transform_indices = @transform_2, window_bounds = array<i64: 8, 8>}]} {
    %c0 = arith.constant 0 : index
    %c0_0 = arith.constant 0 : index
    %0 = vector.load %arg1[%c0, %c0_0] : memref<8x32xf32, #tpu.memory_space<vmem>>, vector<8x32xf32>
    %c0_1 = arith.constant 0 : index
    %c0_2 = arith.constant 0 : index
    %1 = vector.load %arg2[%c0_1, %c0_2] : memref<8x32xf32, #tpu.memory_space<vmem>>, vector<8x32xf32>
    %2 = arith.mulf %0, %0 : vector<8x32xf32>
    %cst = arith.constant dense<0.000000e+00> : vector<8xf32>
    %3 = vector.multi_reduction <add>, %2, %cst [1] : vector<8x32xf32> to vector<8xf32>
    %4 = vector.shape_cast %3 : vector<8xf32> to vector<8x1xf32>
    %cst_3 = arith.constant 1.000000e-16 : f32
    %5 = vector.broadcast %cst_3 : f32 to vector<8x1xf32>
    %6 = arith.maximumf %4, %5 : vector<8x1xf32>
    %7 = math.rsqrt %6 : vector<8x1xf32>
    %cst_4 = arith.constant 2.000000e+01 : f32
    %8 = vector.broadcast %cst_4 : f32 to vector<8x1xf32>
    %9 = arith.mulf %8, %7 : vector<8x1xf32>
    %10 = arith.mulf %1, %1 : vector<8x32xf32>
    %cst_5 = arith.constant dense<0.000000e+00> : vector<8xf32>
    %11 = vector.multi_reduction <add>, %10, %cst_5 [1] : vector<8x32xf32> to vector<8xf32>
    %12 = vector.shape_cast %11 : vector<8xf32> to vector<8x1xf32>
    %cst_6 = arith.constant 1.000000e-16 : f32
    %13 = vector.broadcast %cst_6 : f32 to vector<8x1xf32>
    %14 = arith.maximumf %12, %13 : vector<8x1xf32>
    %15 = math.rsqrt %14 : vector<8x1xf32>
    %16 = vector.broadcast %9 : vector<8x1xf32> to vector<8x32xf32>
    %17 = arith.mulf %0, %16 : vector<8x32xf32>
    %18 = vector.broadcast %15 : vector<8x1xf32> to vector<8x32xf32>
    %19 = arith.mulf %1, %18 : vector<8x32xf32>
    %cst_7 = arith.constant dense<0.000000e+00> : vector<8x8xf32>
    %20 = tpu.matmul %17, %19, %cst_7 {dimension_numbers = #tpu.dot_dimension_numbers<[1], [1], [0], [0], [0, 0, 1, 0], [], []>} : vector<8x32xf32>, vector<8x32xf32>, vector<8x8xf32> -> vector<8x8xf32>
    %c0_8 = arith.constant 0 : index
    %c0_9 = arith.constant 0 : index
    %21 = vector.load %arg3[%c0_8, %c0_9] : memref<8x8xf32, #tpu.memory_space<vmem>>, vector<8x8xf32>
    tpu.vector_store %arg3[%c0_8, %c0_9], %20 {strides = array<i32>} : memref<8x8xf32, #tpu.memory_space<vmem>>, vector<8x8xf32>,
    return
  }
  func.func @transform_0(%arg0: i32) -> (i32, i32) {
    %c0_i32 = arith.constant 0 : i32
    %c0_i32_0 = arith.constant 0 : i32
    %c0_i32_1 = arith.constant 0 : i32
    return %c0_i32, %c0_i32_0 : i32, i32
  }
  func.func @transform_1(%arg0: i32) -> (i32, i32) {
    %c0_i32 = arith.constant 0 : i32
    %c0_i32_0 = arith.constant 0 : i32
    %c0_i32_1 = arith.constant 0 : i32
    return %c0_i32, %c0_i32_0 : i32, i32
  }
  func.func @transform_2(%arg0: i32) -> (i32, i32) {
    %c0_i32 = arith.constant 0 : i32
    %c0_i32_0 = arith.constant 0 : i32
    %c0_i32_1 = arith.constant 0 : i32
    return %c0_i32, %c0_i32_0 : i32, i32
  }
}

</mosaic_0001>

<llo_original>
// kernel: tpu_custom_call.1
$region0: #{tpu_custom_call.1}
  #allocation0 [shape = 'u32[]', space=smem, size = 0x4, offset = 0x4, fixed_abs, tag = 'smem constant byte address 0x4 - core index']
  #allocation1 [shape = 'u32[144,128]{1,0:T(1,128)}', space=vmem, size = 0x12000, scoped, tag = 'internal scratch']
  %s0 = inlined_call_operand.hbm [shape: f32[8,32], index: 0, kind: input, shape index: {}]
  %s1 = inlined_call_operand.hbm [shape: f32[8,32], index: 1, kind: input, shape index: {}]
  %s2 = inlined_call_operand.hbm [shape: f32[8,8], index: 2, kind: output, shape index: {}]
  %s3 = sld [smem:[#allocation0]]
  $region26: #{tpu_custom_call.1} parent=0
    _
  %s5 = ssub.s32 1, %s3
  %s6 = scalar_select 0, %s5, %s3
  $region1: #{tpu_custom_call.1} parent=0
    #allocation2 [shape = 'u8[4096]{0}', space=vmem, size = 0x1000, scoped, tag = 'input window, operand 0, single buffered']
    #allocation3 [shape = 's32[1]{0}', space=sflag, size = 0x4, scoped, tag = 'scoped memory for tpu_custom_call.1']
    #allocation4 [shape = 's32[1]{0}', space=sflag, size = 0x4, scoped, tag = 'scoped memory for tpu_custom_call.1']
    #allocation5 [shape = 'u8[4096]{0}', space=vmem, size = 0x1000, scoped, tag = 'input window, operand 1, single buffered']
    #allocation6 [shape = 's32[1]{0}', space=sflag, size = 0x4, scoped, tag = 'scoped memory for tpu_custom_call.1']
    #allocation7 [shape = 'u8[4096]{0}', space=vmem, size = 0x1000, scoped, tag = 'output window, operand 0, single buffered']
    %7 = vsyncpa [#allocation3], 0
    %8 = vsyncpa [#allocation6], 0
    %9 = vsyncpa [#allocation4], 0
    // Predicated region
    $region2: #{tpu_custom_call.1} parent=1 // pred_check
      _
    $region3: #{tpu_custom_call.1} parent=1 // pred_check_branch
      %11 = sbr.rel (0) target = $region5
    $region4: #{tpu_custom_call.1} parent=1 // pred_region
      %s13 = ssub.s32 128, 128
      %14 = vsyncadd [#allocation3], %s13
      %s16 = sshll.u32 [#allocation2], 4
      %s17 = int_to_ptr.vmem [resolvable:$true] %s16
      %19 = dma.hbm_to_vmem [thread:$0]  %s0, 128, %s17, [#allocation3]
    $region5: #{tpu_custom_call.1} parent=1 // pred_fallthru
      _
    // Predicated region
    $region6: #{tpu_custom_call.1} parent=1 // pred_check
      _
    $region7: #{tpu_custom_call.1} parent=1 // pred_check_branch
      %21 = sbr.rel (0) target = $region9
    $region8: #{tpu_custom_call.1} parent=1 // pred_region
      %s23 = ssub.s32 128, 128
      %24 = vsyncadd [#allocation6], %s23
      %s26 = sshll.u32 [#allocation5], 4
      %s27 = int_to_ptr.vmem [resolvable:$true] %s26
      %29 = dma.hbm_to_vmem [thread:$0]  %s1, 128, %s27, [#allocation6]
    $region9: #{tpu_custom_call.1} parent=1 // pred_fallthru
      _
    // Predicated region
    $region10: #{tpu_custom_call.1} parent=1 // pred_check
      _
    $region11: #{tpu_custom_call.1} parent=1 // pred_check_branch
      %31 = sbr.rel (0) target = $region13
    $region12: #{tpu_custom_call.1} parent=1 // pred_region
      %32 = dma.done [#allocation3], 128
    $region13: #{tpu_custom_call.1} parent=1 // pred_fallthru
      _
    // Predicated region
    $region14: #{tpu_custom_call.1} parent=1 // pred_check
      _
    $region15: #{tpu_custom_call.1} parent=1 // pred_check_branch
      %34 = sbr.rel (0) target = $region17
    $region16: #{tpu_custom_call.1} parent=1 // pred_region
      %35 = dma.done [#allocation6], 128
    $region17: #{tpu_custom_call.1} parent=1 // pred_fallthru
      _
    %v36 = vld [vmem:[#allocation2] sm:$0xff]
    %v37 = vld [vmem:[#allocation5] sm:$0xff]
    %v38 = vmul.f32 %v36, %v36
    %vm39 = vcmask 261120
    %v40 = vsel %vm39, %v38, 0.0
    %41 = vadd.xlane.f32.xlu0 %v40
    %v42 = vpop.xlane.xlu0 %41
    %v43 = vmax.f32 %v42, 1e-16
    %v44 = vrsqrt.pop %v43
    %v45 = vmul.f32 %v44, 20.0
    %v46 = vmul.f32 %v37, %v37
    %v47 = vsel %vm39, %v46, 0.0
    %48 = vadd.xlane.f32.xlu0 %v47
    %v49 = vpop.xlane.xlu0 %48
    %v50 = vmax.f32 %v49, 1e-16
    %v51 = vrsqrt.pop %v50
    %v52 = vmul.f32 %v36, %v45
    %v53 = vmul.f32 %v37, %v51
    %v55 = vsel %vm39, %v52, 0
    %v58 = vsel %vm39, %v53, 0
    %60 = vmatprep.subr.mxu0 0.0
    %61 = vmatpush1.xpose.msra.mxu0 %v58
    %62 = vmatprep.subr.mxu0 0.0
    %63 = vmatpush1.xpose.msra.mxu0 0.0
    %64 = vmatprep.subr.mxu0 0.0
    %65 = vmatpush1.xpose.msra.mxu0 0.0
    %66 = vmatprep.subr.mxu0 0.0
    %67 = vmatpush1.xpose.msra.mxu0 0.0
    %68 = vmatprep.subr.mxu0 0.0
    %69 = vmatpush1.xpose.msra.mxu0 0.0
    %70 = vmatprep.subr.mxu0 0.0
    %71 = vmatpush1.xpose.msra.mxu0 0.0
    %72 = vmatprep.subr.mxu0 0.0
    %73 = vmatpush1.xpose.msra.mxu0 0.0
    %74 = vmatprep.subr.mxu0 0.0
    %75 = vmatpush1.xpose.msra.mxu0 0.0
    %76 = vmatprep.subr.mxu0 0.0
    %77 = vmatpush1.xpose.msra.mxu0 0.0
    %78 = vmatprep.subr.mxu0 0.0
    %79 = vmatpush1.xpose.msra.mxu0 0.0
    %80 = vmatprep.subr.mxu0 0.0
    %81 = vmatpush1.xpose.msra.mxu0 0.0
    %82 = vmatprep.subr.mxu0 0.0
    %83 = vmatpush1.xpose.msra.mxu0 0.0
    %84 = vmatprep.subr.mxu0 0.0
    %85 = vmatpush1.xpose.msra.mxu0 0.0
    %86 = vmatprep.subr.mxu0 0.0
    %87 = vmatpush1.xpose.msra.mxu0 0.0
    %88 = vmatprep.subr.mxu0 0.0
    %89 = vmatpush1.xpose.msra.mxu0 0.0
    %90 = vmatprep.subr.mxu0 0.0
    %91 = vmatpush1.xpose.msra.mxu0 0.0
    %92 = vmatprep.subr.mxu0 0.0
    %93 = vmatpush1.xpose.msra.mxu0 0.0
    %94 = vmatprep.subr.mxu0 0.0
    %95 = vmatpush1.xpose.msra.mxu0 0.0
    %96 = vmatprep.subr.mxu0 0.0
    %97 = vmatpush1.xpose.msra.mxu0 0.0
    %98 = vmatprep.subr.mxu0 0.0
    %99 = vmatpush1.xpose.msra.mxu0 0.0
    %100 = vmatprep.subr.mxu0 0.0
    %101 = vmatpush1.xpose.msra.mxu0 0.0
    %102 = vmatprep.subr.mxu0 0.0
    %103 = vmatpush1.xpose.msra.mxu0 0.0
    %104 = vmatprep.subr.mxu0 0.0
    %105 = vmatpush1.xpose.msra.mxu0 0.0
    %106 = vmatprep.subr.mxu0 0.0
    %107 = vmatpush1.xpose.msra.mxu0 0.0
    %108 = vmatprep.subr.mxu0 0.0
    %109 = vmatpush1.xpose.msra.mxu0 0.0
    %110 = vmatprep.subr.mxu0 0.0
    %111 = vmatpush1.xpose.msra.mxu0 0.0
    %112 = vmatprep.subr.mxu0 0.0
    %113 = vmatpush1.xpose.msra.mxu0 0.0
    %114 = vmatprep.subr.mxu0 0.0
    %115 = vmatpush1.xpose.msra.mxu0 0.0
    %116 = vmatprep.subr.mxu0 0.0
    %117 = vmatpush1.xpose.msra.mxu0 0.0
    %118 = vmatprep.subr.mxu0 0.0
    %119 = vmatpush1.xpose.msra.mxu0 0.0
    %120 = vmatprep.subr.mxu0 0.0
    %121 = vmatpush1.xpose.msra.mxu0 0.0
    %122 = vmatprep.subr.mxu0 0.0
    %123 = vmatpush1.xpose.msra.mxu0 0.0
    %124 = vmatprep.mubr.f32.mxu0 0.0
    %125 = vmatmul.mubr.f32.gmra.mrb[0].mxu0 %v55
    %v126 = vpop.f32.mrb[0].mxu0
    %v127 = vadd.f32 0.0, %v126
    %v128 = vpop.f32.mrb[0].mxu0
    %129 = vdwg.mxu0
    %vm130 = vcmask 64512
    %131 = vst.msk [vmem:[#allocation7] sm:$0xff] %vm130, %v127
    // Predicated region
    $region18: #{tpu_custom_call.1} parent=1 // pred_check
      _
    $region19: #{tpu_custom_call.1} parent=1 // pred_check_branch
      %133 = sbr.rel (0) target = $region21
    $region20: #{tpu_custom_call.1} parent=1 // pred_region
      %s135 = ssub.s32 128, 128
      %136 = vsyncadd [#allocation4], %s135
      %s138 = sshll.u32 [#allocation7], 4
      %s139 = int_to_ptr.vmem [resolvable:$true] %s138
      %141 = dma.vmem_to_hbm [thread:$0]  %s139, 128, %s2, [#allocation4]
    $region21: #{tpu_custom_call.1} parent=1 // pred_fallthru
      _
    // Predicated region
    $region22: #{tpu_custom_call.1} parent=1 // pred_check
      _
    $region23: #{tpu_custom_call.1} parent=1 // pred_check_branch
      %143 = sbr.rel (0) target = $region25
    $region24: #{tpu_custom_call.1} parent=1 // pred_region
      %144 = dma.done [#allocation4], 128
    $region25: #{tpu_custom_call.1} parent=1 // pred_fallthru
      _
    %145 = vsyncpa [#allocation3], 1
    %146 = vsyncpa [#allocation6], 1
    %147 = vsyncpa [#allocation4], 1

</llo_original>
